<compile_context>
chip_gen: v5e
topology: v5e:2x2
jax: 0.10.0
libtpu: 0.0.40
codegen_flags: <defaults>
</compile_context>

<pallas_src>
import functools

import jax
import jax.numpy as jnp
from jax.experimental import pallas as pl
from jax.experimental.pallas import tpu as pltpu


def _round_up(n: int, m: int) -> int:
    return ((n + m - 1) // m) * m


def _pad2d(a, rows, cols):
    pr, pc = rows - a.shape[0], cols - a.shape[1]
    if pr == 0 and pc == 0:
        return a
    return jnp.pad(a, ((0, pr), (0, pc)))


def _mlp_kernel(x_ref, w1_ref, b1_ref, w2_ref, b2_ref, o_ref):
    # fc1 on the MXU: bf16 inputs, f32 accumulation.
    h = jnp.dot(x_ref[...], w1_ref[...], preferred_element_type=jnp.float32)
    h = jnp.maximum(h + b1_ref[...], 0.0)                       # bias + ReLU in f32
    # fc2 on the MXU: cast activations back to bf16 for full MXU throughput.
    y = jnp.dot(h.astype(w2_ref.dtype), w2_ref[...],
                preferred_element_type=jnp.float32)
    o_ref[...] = (y + b2_ref[...]).astype(o_ref.dtype)          # lane-dense store


@jax.jit
def net_forward(x, w1, b1, w2, b2):
    """Forward pass of Net as a Pallas TPU kernel.

    x  : (B, input_size)         float32
    w1 : (input_size, hidden)    float32   (hidden = input_size * 10)
    b1 : (hidden,)               float32
    w2 : (hidden, output_size)   float32
    b2 : (output_size,)          float32
    returns (B, output_size)     float32
    """
    B, d_in = x.shape
    hidden, d_out = w2.shape

    # Lane-align every feature axis to 128 (hidden=160 -> 256, output=4 -> 128).
    d_pad = _round_up(d_in, 128)
    h_pad = _round_up(hidden, 128)
    o_pad = _round_up(d_out, 128)

    # Batch tiling: TB rows per grid step (multiple of 8), weights VMEM-resident.
    TB = min(_round_up(B, 8), 128)
    b_pad = _round_up(B, TB)
    n_blocks = b_pad // TB

    # Zero-pad (safe: padded hidden columns of W1/b1 are 0 -> relu(0)=0, and the
    # corresponding padded rows of W2 are 0, so padding contributes nothing).
    x_p = _pad2d(x, b_pad, d_pad).astype(jnp.bfloat16)
    w1_p = _pad2d(w1, d_pad, h_pad).astype(jnp.bfloat16)
    w2_p = _pad2d(w2, h_pad, o_pad).astype(jnp.bfloat16)
    b1_p = _pad2d(b1.reshape(1, -1), 1, h_pad)                  # f32
    b2_p = _pad2d(b2.reshape(1, -1), 1, o_pad)                  # f32

    # VMEM budget (sized so it also fits v7x's 64 MiB physical VMEM).
    # TODO(synk): if w1/w2 no longer fit VMEM (large input_size), tile the
    # hidden axis with a reduction grid dim instead of loading them whole.
    bytes_needed = (
        2 * TB * d_pad * 2          # x tile (bf16), double-buffered
        + 2 * TB * o_pad * 4        # out tile (f32), double-buffered
        + 2 * d_pad * h_pad * 2     # w1 (bf16)
        + 2 * h_pad * o_pad * 2     # w2 (bf16)
        + 2 * (h_pad + o_pad) * 4   # biases (f32)
    )
    vmem_limit = int(min(max(2 * bytes_needed, 4 << 20), 48 << 20))

    out_padded = pl.pallas_call(
        _mlp_kernel,
        out_shape=jax.ShapeDtypeStruct((b_pad, o_pad), jnp.float32),
        grid=(n_blocks,),
        in_specs=[
            pl.BlockSpec((TB, d_pad), lambda i: (i, 0)),        # x: streamed
            pl.BlockSpec((d_pad, h_pad), lambda i: (0, 0)),     # w1: resident
            pl.BlockSpec((1, h_pad), lambda i: (0, 0)),         # b1: resident
            pl.BlockSpec((h_pad, o_pad), lambda i: (0, 0)),     # w2: resident
            pl.BlockSpec((1, o_pad), lambda i: (0, 0)),         # b2: resident
        ],
        out_specs=pl.BlockSpec((TB, o_pad), lambda i: (i, 0)),  # lane-dense out
        compiler_params=pltpu.CompilerParams(
            dimension_semantics=("parallel",),
            vmem_limit_bytes=vmem_limit,
        ),
    )(x_p, w1_p, b1_p, w2_p, b2_p)

    return out_padded[:B, :d_out]


def init_params(key, input_size, output_size):
    """Deterministic init mirroring nn.Linear's default U(-1/sqrt(fan_in), +)."""
    hidden = int(input_size * 10)
    k1, k2, k3, k4 = jax.random.split(key, 4)
    bound1 = 1.0 / jnp.sqrt(jnp.float32(input_size))
    bound2 = 1.0 / jnp.sqrt(jnp.float32(hidden))
    w1 = jax.random.uniform(k1, (input_size, hidden), jnp.float32, -bound1, bound1)
    b1 = jax.random.uniform(k2, (hidden,), jnp.float32, -bound1, bound1)
    w2 = jax.random.uniform(k3, (hidden, output_size), jnp.float32, -bound2, bound2)
    b2 = jax.random.uniform(k4, (output_size,), jnp.float32, -bound2, bound2)
    return w1, b1, w2, b2


def _reference(x, w1, b1, w2, b2):
    h = jnp.maximum(x @ w1 + b1, 0.0)
    return h @ w2 + b2


if __name__ == "__main__":
    key = jax.random.PRNGKey(0)
    kx, kp = jax.random.split(key)

    batch = 8
    input_size = 16          # small observation vector
    output_size = 4          # number of actions
    x = jax.random.normal(kx, (batch, input_size), jnp.float32)

    w1, b1, w2, b2 = init_params(kp, input_size, output_size)

    out = net_forward(x, w1, b1, w2, b2)
    out = jax.block_until_ready(out)

    ref = _reference(x, w1, b1, w2, b2)
    assert out.shape == (batch, output_size)
    # bf16 MXU inputs (f32 accumulation) -> loosen tolerances accordingly.
    assert jnp.allclose(out, ref, atol=5e-2, rtol=5e-2), (
        f"max abs err {jnp.max(jnp.abs(out - ref))}")

    print("KERNEL_OK")
</pallas_src>

<mosaic_0001>
module attributes {stable_mosaic.version = 11 : i64} {
  func.func @_mlp_kernel(%arg0: i32, %arg1: memref<8x128xbf16, #tpu.memory_space<vmem>>, %arg2: memref<128x256xbf16, #tpu.memory_space<vmem>>, %arg3: memref<1x256xf32, #tpu.memory_space<vmem>>, %arg4: memref<256x128xbf16, #tpu.memory_space<vmem>>, %arg5: memref<1x128xf32, #tpu.memory_space<vmem>>, %arg6: memref<8x128xf32, #tpu.memory_space<vmem>>) attributes {dimension_semantics = [#tpu.dimension_semantics<parallel>], iteration_bounds = array<i64: 1>, scalar_prefetch = 0 : i64, scratch_operands = 0 : i64, tpu.core_type = #tpu.core_type<tc>, window_params = [{transform_indices = @transform_0, window_bounds = array<i64: 8, 128>}, {pipeline_mode = #tpu.pipeline_mode<synchronous>, transform_indices = @transform_1, window_bounds = array<i64: 128, 256>}, {pipeline_mode = #tpu.pipeline_mode<synchronous>, transform_indices = @transform_2, window_bounds = array<i64: 1, 256>}, {pipeline_mode = #tpu.pipeline_mode<synchronous>, transform_indices = @transform_3, window_bounds = array<i64: 256, 128>}, {pipeline_mode = #tpu.pipeline_mode<synchronous>, transform_indices = @transform_4, window_bounds = array<i64: 1, 128>}, {transform_indices = @transform_5, window_bounds = array<i64: 8, 128>}]} {
    %c0 = arith.constant 0 : index
    %c0_0 = arith.constant 0 : index
    %0 = vector.load %arg1[%c0, %c0_0] : memref<8x128xbf16, #tpu.memory_space<vmem>>, vector<8x128xbf16>
    %c0_1 = arith.constant 0 : index
    %c0_2 = arith.constant 0 : index
    %1 = vector.load %arg2[%c0_1, %c0_2] : memref<128x256xbf16, #tpu.memory_space<vmem>>, vector<128x256xbf16>
    %cst = arith.constant dense<0.000000e+00> : vector<8x256xf32>
    %2 = tpu.matmul %0, %1, %cst {dimension_numbers = #tpu.dot_dimension_numbers<[1], [0], [0], [1], [0, 0, 1, 1], [], []>} : vector<8x128xbf16>, vector<128x256xbf16>, vector<8x256xf32> -> vector<8x256xf32>
    %c0_3 = arith.constant 0 : index
    %c0_4 = arith.constant 0 : index
    %3 = vector.load %arg3[%c0_3, %c0_4] : memref<1x256xf32, #tpu.memory_space<vmem>>, vector<1x256xf32>
    %4 = vector.broadcast %3 : vector<1x256xf32> to vector<8x256xf32>
    %5 = arith.addf %2, %4 : vector<8x256xf32>
    %cst_5 = arith.constant 0.000000e+00 : f32
    %6 = vector.broadcast %cst_5 : f32 to vector<8x256xf32>
    %7 = arith.maximumf %5, %6 : vector<8x256xf32>
    %8 = arith.truncf %7 : vector<8x256xf32> to vector<8x256xbf16>
    %c0_6 = arith.constant 0 : index
    %c0_7 = arith.constant 0 : index
    %9 = vector.load %arg4[%c0_6, %c0_7] : memref<256x128xbf16, #tpu.memory_space<vmem>>, vector<256x128xbf16>
    %cst_8 = arith.constant dense<0.000000e+00> : vector<8x128xf32>
    %10 = tpu.matmul %8, %9, %cst_8 {dimension_numbers = #tpu.dot_dimension_numbers<[1], [0], [0], [1], [0, 0, 1, 1], [], []>} : vector<8x256xbf16>, vector<256x128xbf16>, vector<8x128xf32> -> vector<8x128xf32>
    %c0_9 = arith.constant 0 : index
    %c0_10 = arith.constant 0 : index
    %11 = vector.load %arg5[%c0_9, %c0_10] : memref<1x128xf32, #tpu.memory_space<vmem>>, vector<1x128xf32>
    %12 = vector.broadcast %11 : vector<1x128xf32> to vector<8x128xf32>
    %13 = arith.addf %10, %12 : vector<8x128xf32>
    %c0_11 = arith.constant 0 : index
    %c0_12 = arith.constant 0 : index
    %14 = vector.load %arg6[%c0_11, %c0_12] : memref<8x128xf32, #tpu.memory_space<vmem>>, vector<8x128xf32>
    tpu.vector_store %arg6[%c0_11, %c0_12], %13 {strides = array<i32>} : memref<8x128xf32, #tpu.memory_space<vmem>>, vector<8x128xf32>,
    return
  }
  func.func @transform_0(%arg0: i32) -> (i32, i32) {
    %c0_i32 = arith.constant 0 : i32
    %c0_i32_0 = arith.constant 0 : i32
    return %arg0, %c0_i32 : i32, i32
  }
  func.func @transform_1(%arg0: i32) -> (i32, i32) {
    %c0_i32 = arith.constant 0 : i32
    %c0_i32_0 = arith.constant 0 : i32
    %c0_i32_1 = arith.constant 0 : i32
    return %c0_i32, %c0_i32_0 : i32, i32
  }
  func.func @transform_2(%arg0: i32) -> (i32, i32) {
    %c0_i32 = arith.constant 0 : i32
    %c0_i32_0 = arith.constant 0 : i32
    %c0_i32_1 = arith.constant 0 : i32
    return %c0_i32, %c0_i32_0 : i32, i32
  }
  func.func @transform_3(%arg0: i32) -> (i32, i32) {
    %c0_i32 = arith.constant 0 : i32
    %c0_i32_0 = arith.constant 0 : i32
    %c0_i32_1 = arith.constant 0 : i32
    return %c0_i32, %c0_i32_0 : i32, i32
  }
  func.func @transform_4(%arg0: i32) -> (i32, i32) {
    %c0_i32 = arith.constant 0 : i32
    %c0_i32_0 = arith.constant 0 : i32
    %c0_i32_1 = arith.constant 0 : i32
    return %c0_i32, %c0_i32_0 : i32, i32
  }
  func.func @transform_5(%arg0: i32) -> (i32, i32) {
    %c0_i32 = arith.constant 0 : i32
    %c0_i32_0 = arith.constant 0 : i32
    return %arg0, %c0_i32 : i32, i32
  }
}

</mosaic_0001>

<llo_original>
// kernel: net_forward.1
$region0: #{net_forward.1}
  #allocation0 [shape = 'u32[]', space=smem, size = 0x4, offset = 0x4, fixed_abs, tag = 'smem constant byte address 0x4 - core index']
  #allocation1 [shape = 'u32[72,128]{1,0:T(1,128)}', space=vmem, size = 0x9000, scoped, tag = 'internal scratch']
  %s0 = inlined_call_operand.vmem [shape: bf16[8,128], index: 0, kind: input, shape index: {}]
  %s1 = inlined_call_operand.vmem [shape: bf16[128,256], index: 1, kind: input, shape index: {}]
  %s2 = inlined_call_operand.vmem [shape: f32[1,256], index: 2, kind: input, shape index: {}]
  %s3 = inlined_call_operand.vmem [shape: bf16[256,128], index: 3, kind: input, shape index: {}]
  %s4 = inlined_call_operand.vmem [shape: f32[1,128], index: 4, kind: input, shape index: {}]
  %s5 = inlined_call_operand.vmem [shape: f32[8,128], index: 5, kind: output, shape index: {}]
  %s6 = sld [smem:[#allocation0]]
  $region30: #{net_forward.1} parent=0
    _
  %s8 = ssub.s32 1, %s6
  %s9 = scalar_select 0, %s8, %s6
  // Predicated region
  $region2: #{net_forward.1} parent=0 // pred_check
    _
  $region3: #{net_forward.1} parent=0 // pred_check_branch
    %11 = sbr.rel (0) target = $region5
  $region4: #{net_forward.1} parent=0 // pred_region
    _
  $region5: #{net_forward.1} parent=0 // pred_fallthru
    _
  // Predicated region
  $region6: #{net_forward.1} parent=0 // pred_check
    _
  $region7: #{net_forward.1} parent=0 // pred_check_branch
    %13 = sbr.rel (0) target = $region9
  $region8: #{net_forward.1} parent=0 // pred_region
    _
  $region9: #{net_forward.1} parent=0 // pred_fallthru
    _
  // Predicated region
  $region10: #{net_forward.1} parent=0 // pred_check
    _
  $region11: #{net_forward.1} parent=0 // pred_check_branch
    %15 = sbr.rel (0) target = $region13
  $region12: #{net_forward.1} parent=0 // pred_region
    _
  $region13: #{net_forward.1} parent=0 // pred_fallthru
    _
  // Predicated region
  $region14: #{net_forward.1} parent=0 // pred_check
    _
  $region15: #{net_forward.1} parent=0 // pred_check_branch
    %17 = sbr.rel (0) target = $region17
  $region16: #{net_forward.1} parent=0 // pred_region
    _
  $region17: #{net_forward.1} parent=0 // pred_fallthru
    _
  // Predicated region
  $region18: #{net_forward.1} parent=0 // pred_check
    _
  $region19: #{net_forward.1} parent=0 // pred_check_branch
    %19 = sbr.rel (0) target = $region21
  $region20: #{net_forward.1} parent=0 // pred_region
    _
  $region21: #{net_forward.1} parent=0 // pred_fallthru
    _
  %v20 = vld [vmem:[%s0] sm:$0xf]
  %v21 = vld [vmem:[%s1] sm:$0xff]
  %v22 = vld [vmem:[%s1 + $0x8] sm:$0xff]
  %v23 = vld [vmem:[%s1 + $0x10] sm:$0xff]
  %v24 = vld [vmem:[%s1 + $0x18] sm:$0xff]
  %v25 = vld [vmem:[%s1 + $0x20] sm:$0xff]
  %v26 = vld [vmem:[%s1 + $0x28] sm:$0xff]
  %v27 = vld [vmem:[%s1 + $0x30] sm:$0xff]
  %v28 = vld [vmem:[%s1 + $0x38] sm:$0xff]
  %v29 = vld [vmem:[%s1 + $0x40] sm:$0xff]
  %v30 = vld [vmem:[%s1 + $0x48] sm:$0xff]
  %v31 = vld [vmem:[%s1 + $0x50] sm:$0xff]
  %v32 = vld [vmem:[%s1 + $0x58] sm:$0xff]
  %v33 = vld [vmem:[%s1 + $0x60] sm:$0xff]
  %v34 = vld [vmem:[%s1 + $0x68] sm:$0xff]
  %v35 = vld [vmem:[%s1 + $0x70] sm:$0xff]
  %v36 = vld [vmem:[%s1 + $0x78] sm:$0xff]
  %v37 = vld [vmem:[%s2] sm:$0x3]
  %v39 = vperm.slane %v37, 0
  %v40 = vperm.slane %v37, 1
  %v59 = vunpack.c.l.b16 %v21
  %v60 = vunpack.c.h.b16 %v21
  %v61 = vunpack.c.l.b16 %v22
  %v62 = vunpack.c.h.b16 %v22
  %v63 = vunpack.c.l.b16 %v23
  %v64 = vunpack.c.h.b16 %v23
  %v65 = vunpack.c.l.b16 %v24
  %v66 = vunpack.c.h.b16 %v24
  %v67 = vunpack.c.l.b16 %v25
  %v68 = vunpack.c.h.b16 %v25
  %v69 = vunpack.c.l.b16 %v26
  %v70 = vunpack.c.h.b16 %v26
  %v71 = vunpack.c.l.b16 %v27
  %v72 = vunpack.c.h.b16 %v27
  %v73 = vunpack.c.l.b16 %v28
  %v74 = vunpack.c.h.b16 %v28
  %v75 = vunpack.c.l.b16 %v29
  %v76 = vunpack.c.h.b16 %v29
  %v77 = vunpack.c.l.b16 %v30
  %v78 = vunpack.c.h.b16 %v30
  %v79 = vunpack.c.l.b16 %v31
  %v80 = vunpack.c.h.b16 %v31
  %v81 = vunpack.c.l.b16 %v32
  %v82 = vunpack.c.h.b16 %v32
  %v83 = vunpack.c.l.b16 %v33
  %v84 = vunpack.c.h.b16 %v33
  %v85 = vunpack.c.l.b16 %v34
  %v86 = vunpack.c.h.b16 %v34
  %v87 = vunpack.c.l.b16 %v35
  %v88 = vunpack.c.h.b16 %v35
  %v89 = vunpack.c.l.b16 %v36
  %v90 = vunpack.c.h.b16 %v36
  %v91 = vpack.c.b16 %v61, %v59
  %v92 = vpack.c.b16 %v62, %v60
  %v93 = vpack.c.b16 %v65, %v63
  %v94 = vpack.c.b16 %v66, %v64
  %v95 = vpack.c.b16 %v69, %v67
  %v96 = vpack.c.b16 %v70, %v68
  %v97 = vpack.c.b16 %v73, %v71
  %v98 = vpack.c.b16 %v74, %v72
  %v99 = vpack.c.b16 %v77, %v75
  %v100 = vpack.c.b16 %v78, %v76
  %v101 = vpack.c.b16 %v81, %v79
  %v102 = vpack.c.b16 %v82, %v80
  %v103 = vpack.c.b16 %v85, %v83
  %v104 = vpack.c.b16 %v86, %v84
  %v105 = vpack.c.b16 %v89, %v87
  %v106 = vpack.c.b16 %v90, %v88
  %123 = vmatpush.bf16.msra.mxu0 %v105
  %124 = vmatpush.bf16.msra.mxu0 %v103
  %125 = vmatpush.bf16.msra.mxu0 %v101
  %126 = vmatpush.bf16.msra.mxu0 %v99
  %127 = vmatpush.bf16.msra.mxu0 %v97
  %128 = vmatpush.bf16.msra.mxu0 %v95
  %129 = vmatpush.bf16.msra.mxu0 %v93
  %130 = vmatpush.bf16.msra.mxu0 %v91
  %131 = vmatmul.bf16.gmra.mxu0 %v20
  %v132 = vpop.f32.mrf.mxu0
  %v133 = vadd.f32 %v39, %v132
  %v134 = vpop.f32.mrf.mxu0
  %135 = vdwg.mxu0
  %136 = vmatpush.bf16.msra.mxu0 %v106
  %137 = vmatpush.bf16.msra.mxu0 %v104
  %138 = vmatpush.bf16.msra.mxu0 %v102
  %139 = vmatpush.bf16.msra.mxu0 %v100
  %140 = vmatpush.bf16.msra.mxu0 %v98
  %141 = vmatpush.bf16.msra.mxu0 %v96
  %142 = vmatpush.bf16.msra.mxu0 %v94
  %143 = vmatpush.bf16.msra.mxu0 %v92
  %144 = vmatmul.bf16.gmra.mxu0 %v20
  %v145 = vpop.f32.mrf.mxu0
  %v146 = vadd.f32 %v40, %v145
  %v147 = vpop.f32.mrf.mxu0
  %148 = vdwg.mxu0
  %v149 = vmax.f32 %v133, 0.0
  %v150 = vmax.f32 %v146, 0.0
  %v151 = vpack.c.bf16 %v149, %v149
  %v152 = vpack.c.bf16 %v150, %v150
  %v153 = vld [vmem:[%s3] sm:$0xf]
  %v154 = vld [vmem:[%s3 + $0x4] sm:$0xf]
  %v155 = vld [vmem:[%s3 + $0x8] sm:$0xf]
  %v156 = vld [vmem:[%s3 + $0xc] sm:$0xf]
  %v157 = vld [vmem:[%s3 + $0x10] sm:$0xf]
  %v158 = vld [vmem:[%s3 + $0x14] sm:$0xf]
  %v159 = vld [vmem:[%s3 + $0x18] sm:$0xf]
  %v160 = vld [vmem:[%s3 + $0x1c] sm:$0xf]
  %v161 = vld [vmem:[%s3 + $0x20] sm:$0xf]
  %v162 = vld [vmem:[%s3 + $0x24] sm:$0xf]
  %v163 = vld [vmem:[%s3 + $0x28] sm:$0xf]
  %v164 = vld [vmem:[%s3 + $0x2c] sm:$0xf]
  %v165 = vld [vmem:[%s3 + $0x30] sm:$0xf]
  %v166 = vld [vmem:[%s3 + $0x34] sm:$0xf]
  %v167 = vld [vmem:[%s3 + $0x38] sm:$0xf]
  %v168 = vld [vmem:[%s3 + $0x3c] sm:$0xf]
  %v169 = vld [vmem:[%s3 + $0x40] sm:$0xf]
  %v170 = vld [vmem:[%s3 + $0x44] sm:$0xf]
  %v171 = vld [vmem:[%s3 + $0x48] sm:$0xf]
  %v172 = vld [vmem:[%s3 + $0x4c] sm:$0xf]
  %v173 = vld [vmem:[%s3 + $0x50] sm:$0xf]
  %v174 = vld [vmem:[%s3 + $0x54] sm:$0xf]
  %v175 = vld [vmem:[%s3 + $0x58] sm:$0xf]
  %v176 = vld [vmem:[%s3 + $0x5c] sm:$0xf]
  %v177 = vld [vmem:[%s3 + $0x60] sm:$0xf]
  %v178 = vld [vmem:[%s3 + $0x64] sm:$0xf]
  %v179 = vld [vmem:[%s3 + $0x68] sm:$0xf]
  %v180 = vld [vmem:[%s3 + $0x6c] sm:$0xf]
  %v181 = vld [vmem:[%s3 + $0x70] sm:$0xf]
  %v182 = vld [vmem:[%s3 + $0x74] sm:$0xf]
  %v183 = vld [vmem:[%s3 + $0x78] sm:$0xf]
  %v184 = vld [vmem:[%s3 + $0x7c] sm:$0xf]
  %v185 = vld [vmem:[%s4] sm:$0x1]
  %v187 = vperm.slane %v185, 0
  %v221 = vunpack.c.l.b16 %v153
  %v222 = vunpack.c.l.b16 %v154
  %v223 = vunpack.c.l.b16 %v155
  %v224 = vunpack.c.l.b16 %v156
  %v225 = vunpack.c.l.b16 %v157
  %v226 = vunpack.c.l.b16 %v158
  %v227 = vunpack.c.l.b16 %v159
  %v228 = vunpack.c.l.b16 %v160
  %v229 = vunpack.c.l.b16 %v161
  %v230 = vunpack.c.l.b16 %v162
  %v231 = vunpack.c.l.b16 %v163
  %v232 = vunpack.c.l.b16 %v164
  %v233 = vunpack.c.l.b16 %v165
  %v234 = vunpack.c.l.b16 %v166
  %v235 = vunpack.c.l.b16 %v167
  %v236 = vunpack.c.l.b16 %v168
  %v237 = vunpack.c.l.b16 %v169
  %v238 = vunpack.c.l.b16 %v170
  %v239 = vunpack.c.l.b16 %v171
  %v240 = vunpack.c.l.b16 %v172
  %v241 = vunpack.c.l.b16 %v173
  %v242 = vunpack.c.l.b16 %v174
  %v243 = vunpack.c.l.b16 %v175
  %v244 = vunpack.c.l.b16 %v176
  %v245 = vunpack.c.l.b16 %v177
  %v246 = vunpack.c.l.b16 %v178
  %v247 = vunpack.c.l.b16 %v179
  %v248 = vunpack.c.l.b16 %v180
  %v249 = vunpack.c.l.b16 %v181
  %v250 = vunpack.c.l.b16 %v182
  %v251 = vunpack.c.l.b16 %v183
  %v252 = vunpack.c.l.b16 %v184
  %v253 = vpack.c.b16 %v222, %v221
  %v254 = vpack.c.b16 %v224, %v223
  %v255 = vpack.c.b16 %v226, %v225
  %v256 = vpack.c.b16 %v228, %v227
  %v257 = vpack.c.b16 %v230, %v229
  %v258 = vpack.c.b16 %v232, %v231
  %v259 = vpack.c.b16 %v234, %v233
  %v260 = vpack.c.b16 %v236, %v235
  %v261 = vpack.c.b16 %v238, %v237
  %v262 = vpack.c.b16 %v240, %v239
  %v263 = vpack.c.b16 %v242, %v241
  %v264 = vpack.c.b16 %v244, %v243
  %v265 = vpack.c.b16 %v246, %v245
  %v266 = vpack.c.b16 %v248, %v247
  %v267 = vpack.c.b16 %v250, %v249
  %v268 = vpack.c.b16 %v252, %v251
  %285 = vmatpush.bf16.msra.mxu0 %v260
  %286 = vmatpush.bf16.msra.mxu0 %v259
  %287 = vmatpush.bf16.msra.mxu0 %v258
  %288 = vmatpush.bf16.msra.mxu0 %v257
  %289 = vmatpush.bf16.msra.mxu0 %v256
  %290 = vmatpush.bf16.msra.mxu0 %v255
  %291 = vmatpush.bf16.msra.mxu0 %v254
  %292 = vmatpush.bf16.msra.mxu0 %v253
  %293 = vmatmul.bf16.gmra.mxu0 %v151
  %v294 = vpop.f32.mrf.mxu0
  %v295 = vadd.f32 %v187, %v294
  %v296 = vpop.f32.mrf.mxu0
  %297 = vdwg.mxu0
  %298 = vmatpush.bf16.msra.mxu0 %v268
  %299 = vmatpush.bf16.msra.mxu0 %v267
  %300 = vmatpush.bf16.msra.mxu0 %v266
  %301 = vmatpush.bf16.msra.mxu0 %v265
  %302 = vmatpush.bf16.msra.mxu0 %v264
  %303 = vmatpush.bf16.msra.mxu0 %v263
  %304 = vmatpush.bf16.msra.mxu0 %v262
  %305 = vmatpush.bf16.msra.mxu0 %v261
  %306 = vmatmul.bf16.gmra.mxu0 %v152
  %v307 = vpop.f32.mrf.mxu0
  %v308 = vadd.f32 %v295, %v307
  %v309 = vpop.f32.mrf.mxu0
  %310 = vdwg.mxu0
  %311 = vst [vmem:[%s5] sm:$0xff] %v308
  // Predicated region
  $region22: #{net_forward.1} parent=0 // pred_check
    _
  $region23: #{net_forward.1} parent=0 // pred_check_branch
    %313 = sbr.rel (0) target = $region25
  $region24: #{net_forward.1} parent=0 // pred_region
    _
  $region25: #{net_forward.1} parent=0 // pred_fallthru
    _
  // Predicated region
  $region26: #{net_forward.1} parent=0 // pred_check
    _
  $region27: #{net_forward.1} parent=0 // pred_check_branch
    %315 = sbr.rel (0) target = $region29
  $region28: #{net_forward.1} parent=0 // pred_region
    _
  $region29: #{net_forward.1} parent=0 // pred_fallthru
    _

</llo_original>
